<compile_context>
chip_gen: v7x
topology: tpu7x:2x2x1
jax: 0.10.0
libtpu: 0.0.40
codegen_flags: <defaults>
</compile_context>

<pallas_src>
import functools
import math

import jax
import jax.numpy as jnp
from jax import lax
from jax.experimental import pallas as pl
from jax.experimental.pallas import tpu as pltpu

EPS = 1e-8


def _linear_no_bias(v, w_ref):
    """v @ W^T for a PyTorch-layout weight W of shape (out_features, in_features)."""
    return lax.dot_general(
        v, w_ref[...].astype(jnp.float32),
        dimension_numbers=(((1,), (1,)), ((), ())),
        preferred_element_type=jnp.float32,
    )


def _dain_kernel(*refs, mode):
    """DAIN forward on one (tb, T, D) batch tile.  `mode` is static (trace-time)."""
    if mode == 'avg':
        x_ref, o_ref = refs
    elif mode == 'adaptive_avg':
        x_ref, wm_ref, o_ref = refs
    elif mode == 'adaptive_scale':
        x_ref, wm_ref, ws_ref, o_ref = refs
    elif mode == 'full':
        x_ref, wm_ref, ws_ref, wg_ref, bg_ref, o_ref = refs
    else:
        raise AssertionError(f"unknown mode {mode!r}")

    x = x_ref[...].astype(jnp.float32)          # (tb, T, D); lane dim = D
    avg = jnp.mean(x, axis=1)                   # (tb, D): reduce over time (sublanes)

    if mode == 'avg':
        o_ref[...] = (x - avg[:, None, :]).astype(o_ref.dtype)
        return

    # --- adaptive mean subtraction ---
    a = _linear_no_bias(avg, wm_ref)            # (tb, D)
    y = x - a[:, None, :]                       # centered tensor (tb, T, D)

    if mode == 'adaptive_avg':
        o_ref[...] = y.astype(o_ref.dtype)
        return

    # --- adaptive scaling: all stats stay on (tb, D); x gets ONE multiply ---
    std = jnp.sqrt(jnp.mean(y * y, axis=1) + EPS)          # (tb, D)
    adaptive_std = _linear_no_bias(std, ws_ref)            # (tb, D)
    adaptive_std = jnp.where(adaptive_std <= EPS, jnp.float32(1.0), adaptive_std)
    # Reciprocal on the tiny (tb, D) stat -> the big tensor only sees a VPU
    # multiply (no divide over B*D*T elements).  approx=False keeps us well
    # inside the reference tolerance; flip to approx=True if the model allows.
    inv_std = pl.reciprocal(adaptive_std, approx=False)    # (tb, D)

    if mode == 'adaptive_scale':
        mult = inv_std
    else:  # mode == 'full'
        # mean_T((x - a) / s) == (mean_T(x) - a) * (1/s): derived purely from
        # the (tb, D) stats -> no third reduction pass over the big tensor.
        avg2 = (avg - a) * inv_std                                   # (tb, D)
        gate = jax.nn.sigmoid(_linear_no_bias(avg2, wg_ref)
                              + bg_ref[...].astype(jnp.float32))     # (tb, D)
        mult = inv_std * gate          # fused gate * (1/std) multiplier

    o_ref[...] = (y * mult[:, None, :]).astype(o_ref.dtype)


def _pick_block_b(B, T, D, block_b=None, budget_bytes=3 << 20):
    """Batch-tile size: ~3 MiB of f32 per block so that double-buffered input
    + output + in-kernel temporaries stay well under v7x's 64 MiB VMEM."""
    if block_b is not None:
        return max(1, min(int(block_b), B))
    per_row = T * D * 4
    return int(max(1, min(B, budget_bytes // per_row)))


def _cost_estimate(B, D, T, mode, itemsize):
    elems = B * D * T
    passes = {'avg': 2, 'adaptive_avg': 3, 'adaptive_scale': 5, 'full': 6}[mode]
    matmuls = {'avg': 0, 'adaptive_avg': 1, 'adaptive_scale': 2, 'full': 3}[mode]
    flops = passes * elems + matmuls * 2 * B * D * D
    transcendentals = B * D if mode in ('adaptive_scale', 'full') else 0
    bytes_accessed = 2 * elems * itemsize + matmuls * D * D * 4
    if mode == 'full':
        bytes_accessed += D * 4
    return pl.CostEstimate(flops=int(flops),
                           transcendentals=int(transcendentals),
                           bytes_accessed=int(bytes_accessed))


def dain_forward(x, w_mean=None, w_scale=None, w_gate=None, b_gate=None,
                 mode='adaptive_avg', block_b=None):
    """Pallas-backed DAIN_Layer.forward.

    x:        (B, D, T)   (PyTorch layout)
    w_mean:   (D, D)      mean_layer.weight   (no bias)
    w_scale:  (D, D)      scaling_layer.weight (no bias)
    w_gate:   (D, D)      gating_layer.weight
    b_gate:   (1, D)      gating_layer.bias (kept 2D for TPU layout)
    """
    if mode is None:
        return x                                   # identity: no kernel needed

    B, D, T = x.shape
    tb = _pick_block_b(B, T, D, block_b)
    num_blocks = pl.cdiv(B, tb)

    # Lane-dense layout: feature dim D last (layout plumbing only).
    xt = jnp.transpose(x, (0, 2, 1))               # (B, T, D)

    spec_x = pl.BlockSpec((tb, T, D), lambda i: (i, 0, 0))
    spec_w = pl.BlockSpec((D, D), lambda i: (0, 0))     # resident across steps
    spec_b = pl.BlockSpec((1, D), lambda i: (0, 0))

    if mode == 'avg':
        operands, in_specs = (xt,), [spec_x]
    elif mode == 'adaptive_avg':
        operands, in_specs = (xt, w_mean), [spec_x, spec_w]
    elif mode == 'adaptive_scale':
        operands, in_specs = (xt, w_mean, w_scale), [spec_x, spec_w, spec_w]
    elif mode == 'full':
        operands = (xt, w_mean, w_scale, w_gate, b_gate)
        in_specs = [spec_x, spec_w, spec_w, spec_w, spec_b]
    else:
        raise ValueError(f"unknown mode {mode!r}")

    out_t = pl.pallas_call(
        functools.partial(_dain_kernel, mode=mode),
        out_shape=jax.ShapeDtypeStruct((B, T, D), x.dtype),
        grid=(num_blocks,),
        in_specs=in_specs,
        out_specs=spec_x,
        compiler_params=pltpu.CompilerParams(
            dimension_semantics=("parallel",),      # megacore / v7x 2-TC sharding
            vmem_limit_bytes=40 * 1024 * 1024),
        cost_estimate=_cost_estimate(B, D, T, mode, x.dtype.itemsize),
    )(*operands)

    return jnp.transpose(out_t, (0, 2, 1))         # back to (B, D, T)


def dain_reference(x, w_mean, w_scale, w_gate, b_gate, mode='adaptive_avg'):
    """Pure-JAX reference mirroring the PyTorch forward (for validation)."""
    x = x.astype(jnp.float32)
    if mode is None:
        return x
    if mode == 'avg':
        return x - jnp.mean(x, axis=2, keepdims=True)
    avg = jnp.mean(x, axis=2)
    x = x - (avg @ w_mean.T)[:, :, None]
    if mode == 'adaptive_avg':
        return x
    std = jnp.sqrt(jnp.mean(x * x, axis=2) + EPS)
    adaptive_std = std @ w_scale.T
    adaptive_std = jnp.where(adaptive_std <= EPS, 1.0, adaptive_std)
    x = x / adaptive_std[:, :, None]
    if mode == 'adaptive_scale':
        return x
    avg2 = jnp.mean(x, axis=2)
    gate = jax.nn.sigmoid(avg2 @ w_gate.T + b_gate[0])
    return x * gate[:, :, None]


if __name__ == "__main__":
    # Small shapes consistent with the module: (batch, input_dim=144, seq_len).
    # block_b=2 -> a 2-step grid, exercising pipelining + weight residency.
    B, D, T = 4, 144, 16

    key = jax.random.PRNGKey(0)
    kx, kg, kb = jax.random.split(key, 3)

    x = jax.random.normal(kx, (B, D, T), dtype=jnp.float32) * 2.0 + 0.5

    # Parameter init mirroring DAIN_Layer.__init__:
    #   mean_layer / scaling_layer weights = identity, no bias;
    #   gating_layer = Linear(D, D) with deterministic pseudo-random weight/bias.
    w_mean = jnp.eye(D, dtype=jnp.float32)
    w_scale = jnp.eye(D, dtype=jnp.float32)
    bound = 1.0 / math.sqrt(D)
    w_gate = jax.random.uniform(kg, (D, D), jnp.float32, -bound, bound)
    b_gate = jax.random.uniform(kb, (1, D), jnp.float32, -bound, bound)

    ok = True
    for mode in (None, 'avg', 'adaptive_avg', 'adaptive_scale', 'full'):
        out = dain_forward(x, w_mean, w_scale, w_gate, b_gate,
                           mode=mode, block_b=2)
        out = jax.block_until_ready(out)
        ref = dain_reference(x, w_mean, w_scale, w_gate, b_gate, mode=mode)
        if not jnp.allclose(out, ref, atol=1e-4, rtol=1e-4):
            ok = False
            print(f"mode={mode}: max abs err "
                  f"{float(jnp.max(jnp.abs(out - ref)))}")

    if ok:
        print("KERNEL_OK")
</pallas_src>

<mosaic_0001>
module attributes {stable_mosaic.version = 11 : i64} {
  func.func @_dain_kernel(%arg0: i32, %arg1: memref<2x16x144xf32, #tpu.memory_space<vmem>>, %arg2: memref<2x16x144xf32, #tpu.memory_space<vmem>>) attributes {dimension_semantics = [#tpu.dimension_semantics<parallel>], iteration_bounds = array<i64: 2>, scalar_prefetch = 0 : i64, scratch_operands = 0 : i64, tpu.core_type = #tpu.core_type<tc>, window_params = [{transform_indices = @transform_0, window_bounds = array<i64: 2, 16, 144>}, {transform_indices = @transform_1, window_bounds = array<i64: 2, 16, 144>}]} {
    %c0 = arith.constant 0 : index
    %c0_0 = arith.constant 0 : index
    %c0_1 = arith.constant 0 : index
    %0 = vector.load %arg1[%c0, %c0_0, %c0_1] : memref<2x16x144xf32, #tpu.memory_space<vmem>>, vector<2x16x144xf32>
    %cst = arith.constant dense<0.000000e+00> : vector<2x144xf32>
    %1 = vector.multi_reduction <add>, %0, %cst [1] : vector<2x16x144xf32> to vector<2x144xf32>
    %cst_2 = arith.constant 1.600000e+01 : f32
    %2 = vector.broadcast %cst_2 : f32 to vector<2x144xf32>
    %3 = arith.divf %1, %2 : vector<2x144xf32>
    %4 = vector.shape_cast %3 : vector<2x144xf32> to vector<2x1x144xf32>
    %5 = vector.broadcast %4 : vector<2x1x144xf32> to vector<2x16x144xf32>
    %6 = arith.subf %0, %5 : vector<2x16x144xf32>
    %c0_3 = arith.constant 0 : index
    %c0_4 = arith.constant 0 : index
    %c0_5 = arith.constant 0 : index
    %7 = vector.load %arg2[%c0_3, %c0_4, %c0_5] : memref<2x16x144xf32, #tpu.memory_space<vmem>>, vector<2x16x144xf32>
    tpu.vector_store %arg2[%c0_3, %c0_4, %c0_5], %6 {strides = array<i32>} : memref<2x16x144xf32, #tpu.memory_space<vmem>>, vector<2x16x144xf32>,
    return
  }
  func.func @transform_0(%arg0: i32) -> (i32, i32, i32) {
    %c0_i32 = arith.constant 0 : i32
    %c0_i32_0 = arith.constant 0 : i32
    %c0_i32_1 = arith.constant 0 : i32
    return %arg0, %c0_i32, %c0_i32_0 : i32, i32, i32
  }
  func.func @transform_1(%arg0: i32) -> (i32, i32, i32) {
    %c0_i32 = arith.constant 0 : i32
    %c0_i32_0 = arith.constant 0 : i32
    %c0_i32_1 = arith.constant 0 : i32
    return %arg0, %c0_i32, %c0_i32_0 : i32, i32, i32
  }
}

</mosaic_0001>

<llo_original>
// kernel: tpu_custom_call.1
$region0: #{tpu_custom_call.1}
  #allocation0 [shape = 'u32[]', space=smem, size = 0x4, offset = 0x4, fixed_abs, tag = 'smem constant byte address 0x4 - core index']
  #allocation1 [shape = 'u32[144,128]{1,0:T(1,128)}', space=vmem, size = 0x12000, scoped, tag = 'internal scratch']
  %s0 = inlined_call_operand.hbm [shape: f32[4,16,144], index: 0, kind: input, shape index: {}]
  %s1 = inlined_call_operand.hbm [shape: f32[4,16,144], index: 1, kind: output, shape index: {}]
  %s2 = sld [smem:[#allocation0]]
  $region41: #{tpu_custom_call.1} parent=0
    _
  %s4 = ssub.s32 1, %s2
  %s5 = scalar_select 0, %s4, %s2
  $region1: #{tpu_custom_call.1} parent=0
    #allocation2 [shape = 'u8[65536]{0}', space=vmem, size = 0x10000, scoped, tag = 'input window, operand 0']
    #allocation3 [shape = 's32[2]{0}', space=sflag, size = 0x8, scoped, tag = 'scoped memory for tpu_custom_call.1']
    #allocation4 [shape = 's32[2]{0}', space=sflag, size = 0x8, scoped, tag = 'scoped memory for tpu_custom_call.1']
    #allocation5 [shape = 'u8[65536]{0}', space=vmem, size = 0x10000, scoped, tag = 'output window, operand 0']
    %6 = vsyncpa [#allocation3], 0
    %s7 = scalar_lea.sflag [#allocation3], 1
    %8 = vsyncpa %s7, 0
    %9 = vsyncpa [#allocation4], 0
    %s10 = scalar_lea.sflag [#allocation4], 1
    %11 = vsyncpa %s10, 0
    loop: start=0, step=1, limit=4
    $region2: #{tpu_custom_call.1} parent=1 // loop_pre_header
      _
    $region3: #{tpu_custom_call.1} parent=1 // loop_header
      %s13 = sphi 0, %s17
      %p14 = scmp.ge.s32.totalorder %s13, 4
      %s23 = sphi 0, %s25
      %s26 = sphi 0, %s23
      %s27 = sphi 0, %s26
      %s43 = sphi 0, %s27
      %s49 = sphi 0, %s51
      %s52 = sphi 0, %s49
      %s53 = sphi 0, %s52
      %s69 = sphi 0, %s53
    $region4: #{tpu_custom_call.1} parent=1 // loop_header_branch
      %16 = sbr.rel (%p14) target = $region8
    $region5: #{tpu_custom_call.1} parent=1 // loop_body
      %s18 = ssub.s32 %s13, 1
      %s19 = ssub.s32 %s13, 2
      %s20 = sadd.s32 %s13, 1
      %s21 = ssub.s32 %s13, %s20
      %p22 = scmp.eq.s32.totalorder %s21, 0
      %s24 = sadd.s32 %s23, 1
      %s25 = scalar_select %p22, %s23, %s24
      %p28 = pneg %p22
      %p29 = scmp.eq.s32.totalorder %s13, 1
      %p30 = por %p28, %p29
      %p31 = scmp.ne.s32.totalorder %s23, %s26
      %p32 = scmp.eq.s32.totalorder %s13, 0
      %p33 = por %p31, %p32
      %p34 = scmp.ne.s32.totalorder %s23, %s26
      %p35 = scmp.eq.s32.totalorder %s18, 1
      %p36 = por %p34, %p35
      %p37 = scmp.ne.s32.totalorder %s26, %s27
      %p38 = scmp.eq.s32.totalorder %s18, 0
      %p39 = por %p37, %p38
      %p40 = scmp.ne.s32.totalorder %s26, %s27
      %p41 = scmp.eq.s32.totalorder %s19, 1
      %p42 = por %p40, %p41
      %p44 = scmp.ne.s32.totalorder %s27, %s43
      %p45 = scmp.eq.s32.totalorder %s19, 0
      %p46 = por %p44, %p45
      %s47 = ssub.s32 %s13, %s20
      %p48 = scmp.eq.s32.totalorder %s47, 0
      %s50 = sadd.s32 %s49, 1
      %s51 = scalar_select %p48, %s49, %s50
      %p54 = pneg %p48
      %p55 = scmp.eq.s32.totalorder %s13, 1
      %p56 = por %p54, %p55
      %p57 = scmp.ne.s32.totalorder %s49, %s52
      %p58 = scmp.eq.s32.totalorder %s13, 0
      %p59 = por %p57, %p58
      %p60 = scmp.ne.s32.totalorder %s49, %s52
      %p61 = scmp.eq.s32.totalorder %s18, 1
      %p62 = por %p60, %p61
      %p63 = scmp.ne.s32.totalorder %s52, %s53
      %p64 = scmp.eq.s32.totalorder %s18, 0
      %p65 = por %p63, %p64
      %p66 = scmp.ne.s32.totalorder %s52, %s53
      %p67 = scmp.eq.s32.totalorder %s19, 1
      %p68 = por %p66, %p67
      %p70 = scmp.ne.s32.totalorder %s53, %s69
      %p71 = scmp.eq.s32.totalorder %s19, 0
      %p72 = por %p70, %p71
      %p73 = scmp.le.s32.totalorder 1, %s13
      %p74 = scmp.lt.s32.totalorder %s13, 3
      %p75 = pnand %p73, %p74
      %p76 = pneg %p75
      // Predicated region
      $region9: #{tpu_custom_call.1} parent=5 // pred_check
        _
      $region10: #{tpu_custom_call.1} parent=5 // pred_check_branch
        %78 = sbr.rel (%p75) target = $region12
      $region11: #{tpu_custom_call.1} parent=5 // pred_region
        %s79 = ssub.s32 %s13, 1
      $region12: #{tpu_custom_call.1} parent=5 // pred_fallthru
        _
      %p80 = scmp.lt.s32.totalorder %s13, 2
      // Predicated region
      $region13: #{tpu_custom_call.1} parent=5 // pred_check
        %p81 = pneg %p80
      $region14: #{tpu_custom_call.1} parent=5 // pred_check_branch
        %83 = sbr.rel (%p81) target = $region16
      $region15: #{tpu_custom_call.1} parent=5 // pred_region
        // Predicated region
        $region17: #{tpu_custom_call.1} parent=15 // pred_check
          %p84 = pneg %p33
        $region18: #{tpu_custom_call.1} parent=15 // pred_check_branch
          %86 = sbr.rel (%p84) target = $region20
        $region19: #{tpu_custom_call.1} parent=15 // pred_region
          %s87 = sand.u32 %s23, 1
          %s88 = scalar_lea.sflag [#allocation3], %s87
          %s89 = sand.u32 %s23, 1
          %s90 = smul.addr %s89, 64
          %s91 = scalar_lea.vmem [#allocation2], %s90
          %s92 = smul.u32 2, %s13
          %s94 = ssub.s32 1024, 1024
          %95 = vsyncadd %s88, %s94
          %s96 = smul.addr %s92, 4
          %s97 = smul.addr %s96, 128
          %s98 = scalar_lea.hbm %s0, %s97
          %s99 = sshll.u32 %s91, 4
          %s100 = int_to_ptr.vmem [resolvable:$true] %s99
          %105 = dma.hbm_to_vmem [thread:$0]  %s98, 1024, %s100, %s88, 256, 256, 16
        $region20: #{tpu_custom_call.1} parent=15 // pred_fallthru
          _
      $region16: #{tpu_custom_call.1} parent=5 // pred_fallthru
        _
      %p106 = scmp.le.s32.totalorder 1, %s13
      %p107 = scmp.lt.s32.totalorder %s13, 3
      %p108 = pnand %p106, %p107
      %p109 = pneg %p108
      // Predicated region
      $region21: #{tpu_custom_call.1} parent=5 // pred_check
        _
      $region22: #{tpu_custom_call.1} parent=5 // pred_check_branch
        %111 = sbr.rel (%p108) target = $region24
      $region23: #{tpu_custom_call.1} parent=5 // pred_region
        %s112 = ssub.s32 %s13, 1
        %s113 = sand.u32 %s26, 1
        %s114 = scalar_lea.sflag [#allocation3], %s113
        %s115 = sand.u32 %s26, 1
        %s116 = smul.addr %s115, 64
        %s117 = scalar_lea.vmem [#allocation2], %s116
        // Predicated region
        $region25: #{tpu_custom_call.1} parent=23 // pred_check
          %p118 = pneg %p39
        $region26: #{tpu_custom_call.1} parent=23 // pred_check_branch
          %120 = sbr.rel (%p118) target = $region28
        $region27: #{tpu_custom_call.1} parent=23 // pred_region
          %121 = dma.done %s114, 1024
        $region28: #{tpu_custom_call.1} parent=23 // pred_fallthru
          _
        %s122 = sand.u32 %s26, 1
        %s123 = scalar_lea.sflag [#allocation3], %s122
        %s124 = sand.u32 %s26, 1
        %s125 = smul.addr %s124, 64
        %s126 = scalar_lea.vmem [#allocation2], %s125
        %p127 = pneg %p39
        %p128 = pneg %p36
        %p129 = pneg %p65
        %p130 = pneg %p62
        %s131 = sand.u32 %s52, 1
        %s132 = scalar_lea.sflag [#allocation4], %s131
        %s133 = sand.u32 %s52, 1
        %s134 = smul.addr %s133, 64
        %s135 = scalar_lea.vmem [#allocation5], %s134
        %s136 = smul.u32 2, %s18
        %s137 = smul.u32 2, %s18
        %v138 = vld [vmem:[%s117] sm:$0xff]
        %v139 = vld [vmem:[%s117 + $0x8] sm:$0xff]
        %v140 = vld [vmem:[%s117 + $0x10] sm:$0xff]
        %v141 = vld [vmem:[%s117 + $0x18] sm:$0xff]
        %v142 = vld [vmem:[%s117 + $0x20] sm:$0xff]
        %v143 = vld [vmem:[%s117 + $0x28] sm:$0xff]
        %v144 = vld [vmem:[%s117 + $0x30] sm:$0xff]
        %v145 = vld [vmem:[%s117 + $0x38] sm:$0xff]
        %v146 = vadd.f32 %v138, %v140
        %v147 = vrot.slane %v146, 4
        %v148 = vadd.f32 %v146, %v147
        %v149 = vrot.slane %v148, 2
        %v150 = vadd.f32 %v148, %v149
        %v151 = vrot.slane %v150, 1
        %v152 = vadd.f32 %v150, %v151
        %vm153 = vcmask 130048
        %v154 = vsel %vm153, %v139, 0.0
        %v155 = vsel %vm153, %v141, 0.0
        %v156 = vadd.f32 %v154, %v155
        %v157 = vrot.slane %v156, 4
        %v158 = vadd.f32 %v156, %v157
        %v159 = vrot.slane %v158, 2
        %v160 = vadd.f32 %v158, %v159
        %v161 = vrot.slane %v160, 1
        %v162 = vadd.f32 %v160, %v161
        %v163 = vadd.f32 %v142, %v144
        %v164 = vrot.slane %v163, 4
        %v165 = vadd.f32 %v163, %v164
        %v166 = vrot.slane %v165, 2
        %v167 = vadd.f32 %v165, %v166
        %v168 = vrot.slane %v167, 1
        %v169 = vadd.f32 %v167, %v168
        %v170 = vsel %vm153, %v143, 0.0
        %v171 = vsel %vm153, %v145, 0.0
        %v172 = vadd.f32 %v170, %v171
        %v173 = vrot.slane %v172, 4
        %v174 = vadd.f32 %v172, %v173
        %v175 = vrot.slane %v174, 2
        %v176 = vadd.f32 %v174, %v175
        %v177 = vrot.slane %v176, 1
        %v178 = vadd.f32 %v176, %v177
        %v179 = vrcp.pop 16.0
        %v180 = vmul.f32 %v152, %v179
        %v181 = vmul.f32 %v162, %v179
        %v182 = vmul.f32 %v169, %v179
        %v183 = vmul.f32 %v178, %v179
        %v184 = vsub.f32 %v138, %v180
        %v185 = vsub.f32 %v139, %v181
        %v186 = vsub.f32 %v140, %v180
        %v187 = vsub.f32 %v141, %v181
        %v188 = vsub.f32 %v142, %v182
        %v189 = vsub.f32 %v143, %v183
        %v190 = vsub.f32 %v144, %v182
        %v191 = vsub.f32 %v145, %v183
        %192 = vst [vmem:[%s135] sm:$0xff] %v184
        %193 = vst.msk [vmem:[%s135 + $0x8] sm:$0xff] %vm153, %v185
        %194 = vst [vmem:[%s135 + $0x10] sm:$0xff] %v186
        %195 = vst.msk [vmem:[%s135 + $0x18] sm:$0xff] %vm153, %v187
        %196 = vst [vmem:[%s135 + $0x20] sm:$0xff] %v188
        %197 = vst.msk [vmem:[%s135 + $0x28] sm:$0xff] %vm153, %v189
        %198 = vst [vmem:[%s135 + $0x30] sm:$0xff] %v190
        %199 = vst.msk [vmem:[%s135 + $0x38] sm:$0xff] %vm153, %v191
        %s200 = sand.u32 %s52, 1
        %s201 = scalar_lea.sflag [#allocation4], %s200
        %s202 = sand.u32 %s52, 1
        %s203 = smul.addr %s202, 64
        %s204 = scalar_lea.vmem [#allocation5], %s203
        // Predicated region
        $region29: #{tpu_custom_call.1} parent=23 // pred_check
          %p205 = pneg %p62
        $region30: #{tpu_custom_call.1} parent=23 // pred_check_branch
          %207 = sbr.rel (%p205) target = $region32
        $region31: #{tpu_custom_call.1} parent=23 // pred_region
          %s208 = smul.u32 2, %s18
          %s210 = ssub.s32 1024, 1024
          %211 = vsyncadd %s201, %s210
          %s212 = smul.addr %s208, 4
          %s213 = smul.addr %s212, 128
          %s214 = scalar_lea.hbm %s1, %s213
          %s215 = sshll.u32 %s204, 4
          %s216 = int_to_ptr.vmem [resolvable:$true] %s215
          %221 = dma.vmem_to_hbm [thread:$0]  %s216, 1024, %s214, %s201, 256, 256, 16
        $region32: #{tpu_custom_call.1} parent=23 // pred_fallthru
          _
      $region24: #{tpu_custom_call.1} parent=5 // pred_fallthru
        _
      %p222 = scmp.le.s32.totalorder 2, %s13
      // Predicated region
      $region33: #{tpu_custom_call.1} parent=5 // pred_check
        %p223 = pneg %p222
      $region34: #{tpu_custom_call.1} parent=5 // pred_check_branch
        %225 = sbr.rel (%p223) target = $region36
      $region35: #{tpu_custom_call.1} parent=5 // pred_region
        %s226 = ssub.s32 %s13, 2
        // Predicated region
        $region37: #{tpu_custom_call.1} parent=35 // pred_check
          %p227 = pneg %p68
        $region38: #{tpu_custom_call.1} parent=35 // pred_check_branch
          %229 = sbr.rel (%p227) target = $region40
        $region39: #{tpu_custom_call.1} parent=35 // pred_region
          %s230 = sand.u32 %s53, 1
          %s231 = scalar_lea.sflag [#allocation4], %s230
          %s232 = sand.u32 %s53, 1
          %s233 = smul.addr %s232, 64
          %s234 = scalar_lea.vmem [#allocation5], %s233
          %235 = dma.done %s231, 1024
        $region40: #{tpu_custom_call.1} parent=35 // pred_fallthru
          _
      $region36: #{tpu_custom_call.1} parent=5 // pred_fallthru
        _
    $region6: #{tpu_custom_call.1} parent=1 // loop_footer
      %s17 = sadd.s32 1, %s13
    $region7: #{tpu_custom_call.1} parent=1 // loop_footer_branch
      %12 = sbr.rel target = $region3
    $region8: #{tpu_custom_call.1} parent=1 // loop_exit
      _
    %236 = vsyncpa [#allocation3], 1
    %s237 = scalar_lea.sflag [#allocation3], 1
    %238 = vsyncpa %s237, 1
    %239 = vsyncpa [#allocation4], 1
    %s240 = scalar_lea.sflag [#allocation4], 1
    %241 = vsyncpa %s240, 1

</llo_original>
